<compile_context>
chip_gen: v7x
topology: tpu7x:2x2x1
jax: 0.10.0
libtpu: 0.0.40
codegen_flags: <defaults>
</compile_context>

<pallas_src>
import jax
import jax.numpy as jnp
from jax.experimental import pallas as pl
from jax.experimental.pallas import tpu as pltpu


def _round_up(n, m):
    return ((n + m - 1) // m) * m


def ae_kernel(inp_ref, x_ref, wx_ref, wh_ref, b_ref, out_ref):
    """One batch tile.  inp/x: [12, TB]; activations [16, TB]; out [8, TB]."""
    relu = lambda v: jnp.maximum(v, 0.0)
    dot = lambda w, a: jnp.dot(w, a, preferred_element_type=jnp.float32)

    inp = inp_ref[...]                                  # noisy input  [12, TB]
    x = x_ref[...]                                      # raw input    [12, TB]

    # Encoder / decoder. Rows are lane... sublane-padded to 16; padded rows stay exactly 0.
    e1 = relu(dot(wx_ref[0], inp) + b_ref[0])           # [16,TB], valid rows :10
    e2 = relu(dot(wh_ref[0], e1) + b_ref[1])            # valid :8
    e3 = relu(dot(wh_ref[1], e2) + b_ref[2])            # valid :6
    d1 = relu(dot(wh_ref[2], e3) + b_ref[3])            # valid :8
    d2 = relu(dot(wh_ref[3], d1 + e2) + b_ref[4])       # valid :10
    d3 = dot(wh_ref[4], d2 + e1) + b_ref[5]             # valid :12

    # mlp: m1 @ cat([d3, x]) == m1[:, :12] @ d3 + m1[:, 12:] @ x   (split done on host)
    h = relu(dot(wh_ref[5], d3) + dot(wx_ref[1], x) + b_ref[6])    # valid :10
    h = relu(dot(wh_ref[6], h) + b_ref[7])                         # valid :8
    logits = dot(wh_ref[7], h) + b_ref[8]                          # rows 5:16 == -1e30

    # Softmax over the class (sublane) axis; padded rows get probability exactly 0.
    m = jnp.max(logits, axis=0, keepdims=True)          # [1, TB]
    e = jnp.exp(logits - m)                              # [16, TB]
    s = jnp.sum(e, axis=0, keepdims=True)                # [1, TB]
    probs = e * pl.reciprocal(s, approx=True)
    out_ref[...] = probs[:8, :]                          # rows :5 are the real classes


def init_raw_params(key):
    """Xavier-normal weights (PyTorch [out, in] layout) and N(0,1) biases, 9 linears."""
    dims = [(12, 10), (10, 8), (8, 6), (6, 8), (8, 10), (10, 12),   # AE linear1..6
            (24, 10), (10, 8), (8, 5)]                              # mlp linears
    Ws, Bs = [], []
    for fan_in, fan_out in dims:
        key, kw, kb = jax.random.split(key, 3)
        std = (2.0 / (fan_in + fan_out)) ** 0.5
        Ws.append(std * jax.random.normal(kw, (fan_out, fan_in), dtype=jnp.float32))
        Bs.append(jax.random.normal(kb, (fan_out,), dtype=jnp.float32))
    return Ws, Bs


def pack_params(Ws, Bs):
    """Pack the 9 linears into three padded resident arrays read by the kernel."""
    w1, w2, w3, w4, w5, w6, m1, m2, m3 = Ws
    m1a, m1b = m1[:, :12], m1[:, 12:]          # host-side split of the concat weight

    def pad(w, rows=16, cols=16):
        return jnp.pad(w, ((0, rows - w.shape[0]), (0, cols - w.shape[1])))

    w_x = jnp.stack([pad(w1, 16, 12), pad(m1b, 16, 12)])                        # [2,16,12]
    w_h = jnp.stack([pad(w) for w in (w2, w3, w4, w5, w6, m1a, m2, m3)])        # [8,16,16]

    b_rows = []
    for i, v in enumerate(Bs):
        # Final layer: padded class rows get -1e30 so softmax assigns them exactly 0
        # (removes the in-kernel iota/where mask).
        fill = -1e30 if i == 8 else 0.0
        b_rows.append(jnp.pad(v, (0, 16 - v.shape[0]), constant_values=fill))
    b = jnp.stack(b_rows)                                                        # [9,16]
    return w_x, w_h, b[:, :, None]                                               # [9,16,1]


def _choose_tile(B, block_b):
    """Lane-aligned batch tile; >=2 grid steps when possible (v7x has 2 TensorCores)."""
    b128 = _round_up(max(B, 1), 128)
    tb = min(block_b, b128)
    if b128 // tb < 2 and b128 >= 256:
        tb = _round_up(pl.cdiv(b128, 2), 128)
    return tb


def ae_forward(x, packed_params, *, key=None, noise_scale=0.01, block_b=4096):
    w_x, w_h, b = packed_params
    x = x.astype(jnp.float32)
    B = x.shape[0]

    # input = x + 0.01 * N(0,1)   (noise drawn host-side; exact Gaussian)
    if noise_scale != 0.0:
        if key is None:
            key = jax.random.PRNGKey(0)
        noise = jax.random.normal(key, x.shape, dtype=jnp.float32)
        inp = x + jnp.float32(noise_scale) * noise
    else:
        inp = x

    TB = _choose_tile(B, block_b)
    B_pad = _round_up(B, TB)
    n_blk = B_pad // TB
    pad_rows = B_pad - B

    # Batch on the 128-lane axis: [12, B_pad] inputs, [8, B_pad] output.
    x_t = jnp.pad(x, ((0, pad_rows), (0, 0))).T
    inp_t = jnp.pad(inp, ((0, pad_rows), (0, 0))).T

    grid_spec = pltpu.PrefetchScalarGridSpec(
        num_scalar_prefetch=0,
        grid=(n_blk,),
        in_specs=[
            pl.BlockSpec((12, TB), lambda i: (0, i)),         # noisy input: batch tiled
            pl.BlockSpec((12, TB), lambda i: (0, i)),         # raw x: batch tiled
            pl.BlockSpec((2, 16, 12), lambda i: (0, 0, 0)),   # packed weights: resident
            pl.BlockSpec((8, 16, 16), lambda i: (0, 0, 0)),
            pl.BlockSpec((9, 16, 1), lambda i: (0, 0, 0)),
        ],
        out_specs=pl.BlockSpec((8, TB), lambda i: (0, i)),
    )

    macs = 12 * 10 + 10 * 8 + 8 * 6 + 6 * 8 + 8 * 10 + 10 * 12 + 24 * 10 + 10 * 8 + 8 * 5
    cost = pl.CostEstimate(
        flops=2 * macs * B_pad,
        transcendentals=17 * B_pad,
        bytes_accessed=(B_pad * (12 + 12 + 8) + 2 * 16 * 12 + 8 * 16 * 16 + 9 * 16) * 4,
    )

    out = pl.pallas_call(
        ae_kernel,
        out_shape=jax.ShapeDtypeStruct((8, B_pad), jnp.float32),
        grid_spec=grid_spec,
        compiler_params=pltpu.CompilerParams(dimension_semantics=("parallel",)),
        cost_estimate=cost,
    )(inp_t, x_t, w_x, w_h, b)
    return out[:5, :B].T                                  # [B, 5]


def ae_reference(x, Ws, Bs):
    """Pure-JAX forward (eval-mode Dropout, zero noise) for correctness checking."""
    w1, w2, w3, w4, w5, w6, m1, m2, m3 = Ws
    b1, b2, b3, b4, b5, b6, mb1, mb2, mb3 = Bs
    relu = lambda v: jnp.maximum(v, 0.0)
    hi = jax.lax.Precision.HIGHEST
    dot = lambda a, w: jnp.dot(a, w.T, precision=hi)      # PyTorch [out,in] layout
    e1 = relu(dot(x, w1) + b1)
    e2 = relu(dot(e1, w2) + b2)
    e3 = relu(dot(e2, w3) + b3)
    d1 = relu(dot(e3, w4) + b4)
    d2 = relu(dot(d1 + e2, w5) + b5)
    d3 = dot(d2 + e1, w6) + b6
    h = relu(dot(jnp.concatenate([d3, x], axis=1), m1) + mb1)
    h = relu(dot(h, m2) + mb2)
    logits = dot(h, m3) + mb3
    return jax.nn.softmax(logits, axis=1)


if __name__ == "__main__":
    key = jax.random.PRNGKey(0)
    k_params, k_x, k_noise = jax.random.split(key, 3)

    B = 100                                    # deliberately not a multiple of the batch tile
    x = jax.random.normal(k_x, (B, 12), dtype=jnp.float32)
    Ws, Bs = init_raw_params(k_params)
    packed = pack_params(Ws, Bs)

    # 1) Noise disabled: kernel must match the pure-JAX reference (checks packing/tiling).
    out0 = jax.block_until_ready(ae_forward(x, packed, noise_scale=0.0, block_b=128))
    ref0 = ae_reference(x, Ws, Bs)
    assert out0.shape == (B, 5)
    assert jnp.allclose(out0, ref0, atol=2e-2, rtol=2e-2)

    # 2) Full module semantics: x + 0.01 * N(0,1) noise on the encoder input.
    out = jax.block_until_ready(
        ae_forward(x, packed, key=k_noise, noise_scale=0.01, block_b=128))
    assert out.shape == (B, 5)
    assert bool(jnp.all(jnp.isfinite(out)))
    assert bool(jnp.all(out >= 0.0))
    assert jnp.allclose(jnp.sum(out, axis=1), 1.0, atol=5e-3)
    # Noise is tiny, so the noisy output must stay close to the noiseless reference.
    assert jnp.allclose(out, ref0, atol=5e-2, rtol=5e-2)

    print("KERNEL_OK")
</pallas_src>

<mosaic_0001>
module attributes {stable_mosaic.version = 11 : i64} {
  func.func @ae_kernel(%arg0: i32, %arg1: memref<12x128xf32, #tpu.memory_space<vmem>>, %arg2: memref<12x128xf32, #tpu.memory_space<vmem>>, %arg3: memref<2x16x12xf32, #tpu.memory_space<vmem>>, %arg4: memref<8x16x16xf32, #tpu.memory_space<vmem>>, %arg5: memref<9x16x1xf32, #tpu.memory_space<vmem>>, %arg6: memref<8x128xf32, #tpu.memory_space<vmem>>) attributes {dimension_semantics = [#tpu.dimension_semantics<parallel>], iteration_bounds = array<i64: 1>, scalar_prefetch = 0 : i64, scratch_operands = 0 : i64, tpu.core_type = #tpu.core_type<tc>, window_params = [{transform_indices = @transform_0, window_bounds = array<i64: 12, 128>}, {transform_indices = @transform_1, window_bounds = array<i64: 12, 128>}, {pipeline_mode = #tpu.pipeline_mode<synchronous>, transform_indices = @transform_2, window_bounds = array<i64: 2, 16, 12>}, {pipeline_mode = #tpu.pipeline_mode<synchronous>, transform_indices = @transform_3, window_bounds = array<i64: 8, 16, 16>}, {pipeline_mode = #tpu.pipeline_mode<synchronous>, transform_indices = @transform_4, window_bounds = array<i64: 9, 16, 1>}, {transform_indices = @transform_5, window_bounds = array<i64: 8, 128>}]} {
    %c0 = arith.constant 0 : index
    %c0_0 = arith.constant 0 : index
    %0 = vector.load %arg1[%c0, %c0_0] : memref<12x128xf32, #tpu.memory_space<vmem>>, vector<12x128xf32>
    %c0_1 = arith.constant 0 : index
    %c0_2 = arith.constant 0 : index
    %1 = vector.load %arg2[%c0_1, %c0_2] : memref<12x128xf32, #tpu.memory_space<vmem>>, vector<12x128xf32>
    %c0_3 = arith.constant 0 : index
    %c0_4 = arith.constant 0 : index
    %c0_5 = arith.constant 0 : index
    %2 = vector.load %arg3[%c0_3, %c0_4, %c0_5] : memref<2x16x12xf32, #tpu.memory_space<vmem>>, vector<1x16x12xf32>
    %3 = vector.shape_cast %2 : vector<1x16x12xf32> to vector<16x12xf32>
    %cst = arith.constant dense<0.000000e+00> : vector<16x128xf32>
    %4 = tpu.matmul %3, %0, %cst {dimension_numbers = #tpu.dot_dimension_numbers<[1], [0], [0], [1], [0, 0, 1, 1], [], []>} : vector<16x12xf32>, vector<12x128xf32>, vector<16x128xf32> -> vector<16x128xf32>
    %c0_6 = arith.constant 0 : index
    %c0_7 = arith.constant 0 : index
    %c0_8 = arith.constant 0 : index
    %5 = vector.load %arg5[%c0_6, %c0_7, %c0_8] : memref<9x16x1xf32, #tpu.memory_space<vmem>>, vector<1x16x1xf32>
    %6 = vector.shape_cast %5 : vector<1x16x1xf32> to vector<16x1xf32>
    %7 = vector.broadcast %6 : vector<16x1xf32> to vector<16x128xf32>
    %8 = arith.addf %4, %7 : vector<16x128xf32>
    %cst_9 = arith.constant 0.000000e+00 : f32
    %9 = vector.broadcast %cst_9 : f32 to vector<16x128xf32>
    %10 = arith.maximumf %8, %9 : vector<16x128xf32>
    %c0_10 = arith.constant 0 : index
    %c0_11 = arith.constant 0 : index
    %c0_12 = arith.constant 0 : index
    %11 = vector.load %arg4[%c0_10, %c0_11, %c0_12] : memref<8x16x16xf32, #tpu.memory_space<vmem>>, vector<1x16x16xf32>
    %12 = vector.shape_cast %11 : vector<1x16x16xf32> to vector<16x16xf32>
    %cst_13 = arith.constant dense<0.000000e+00> : vector<16x128xf32>
    %13 = tpu.matmul %12, %10, %cst_13 {dimension_numbers = #tpu.dot_dimension_numbers<[1], [0], [0], [1], [0, 0, 1, 1], [], []>} : vector<16x16xf32>, vector<16x128xf32>, vector<16x128xf32> -> vector<16x128xf32>
    %c1 = arith.constant 1 : index
    %c0_14 = arith.constant 0 : index
    %c0_15 = arith.constant 0 : index
    %14 = vector.load %arg5[%c1, %c0_14, %c0_15] : memref<9x16x1xf32, #tpu.memory_space<vmem>>, vector<1x16x1xf32>
    %15 = vector.shape_cast %14 : vector<1x16x1xf32> to vector<16x1xf32>
    %16 = vector.broadcast %15 : vector<16x1xf32> to vector<16x128xf32>
    %17 = arith.addf %13, %16 : vector<16x128xf32>
    %cst_16 = arith.constant 0.000000e+00 : f32
    %18 = vector.broadcast %cst_16 : f32 to vector<16x128xf32>
    %19 = arith.maximumf %17, %18 : vector<16x128xf32>
    %c1_17 = arith.constant 1 : index
    %c0_18 = arith.constant 0 : index
    %c0_19 = arith.constant 0 : index
    %20 = vector.load %arg4[%c1_17, %c0_18, %c0_19] : memref<8x16x16xf32, #tpu.memory_space<vmem>>, vector<1x16x16xf32>
    %21 = vector.shape_cast %20 : vector<1x16x16xf32> to vector<16x16xf32>
    %cst_20 = arith.constant dense<0.000000e+00> : vector<16x128xf32>
    %22 = tpu.matmul %21, %19, %cst_20 {dimension_numbers = #tpu.dot_dimension_numbers<[1], [0], [0], [1], [0, 0, 1, 1], [], []>} : vector<16x16xf32>, vector<16x128xf32>, vector<16x128xf32> -> vector<16x128xf32>
    %c2 = arith.constant 2 : index
    %c0_21 = arith.constant 0 : index
    %c0_22 = arith.constant 0 : index
    %23 = vector.load %arg5[%c2, %c0_21, %c0_22] : memref<9x16x1xf32, #tpu.memory_space<vmem>>, vector<1x16x1xf32>
    %24 = vector.shape_cast %23 : vector<1x16x1xf32> to vector<16x1xf32>
    %25 = vector.broadcast %24 : vector<16x1xf32> to vector<16x128xf32>
    %26 = arith.addf %22, %25 : vector<16x128xf32>
    %cst_23 = arith.constant 0.000000e+00 : f32
    %27 = vector.broadcast %cst_23 : f32 to vector<16x128xf32>
    %28 = arith.maximumf %26, %27 : vector<16x128xf32>
    %c2_24 = arith.constant 2 : index
    %c0_25 = arith.constant 0 : index
    %c0_26 = arith.constant 0 : index
    %29 = vector.load %arg4[%c2_24, %c0_25, %c0_26] : memref<8x16x16xf32, #tpu.memory_space<vmem>>, vector<1x16x16xf32>
    %30 = vector.shape_cast %29 : vector<1x16x16xf32> to vector<16x16xf32>
    %cst_27 = arith.constant dense<0.000000e+00> : vector<16x128xf32>
    %31 = tpu.matmul %30, %28, %cst_27 {dimension_numbers = #tpu.dot_dimension_numbers<[1], [0], [0], [1], [0, 0, 1, 1], [], []>} : vector<16x16xf32>, vector<16x128xf32>, vector<16x128xf32> -> vector<16x128xf32>
    %c3 = arith.constant 3 : index
    %c0_28 = arith.constant 0 : index
    %c0_29 = arith.constant 0 : index
    %32 = vector.load %arg5[%c3, %c0_28, %c0_29] : memref<9x16x1xf32, #tpu.memory_space<vmem>>, vector<1x16x1xf32>
    %33 = vector.shape_cast %32 : vector<1x16x1xf32> to vector<16x1xf32>
    %34 = vector.broadcast %33 : vector<16x1xf32> to vector<16x128xf32>
    %35 = arith.addf %31, %34 : vector<16x128xf32>
    %cst_30 = arith.constant 0.000000e+00 : f32
    %36 = vector.broadcast %cst_30 : f32 to vector<16x128xf32>
    %37 = arith.maximumf %35, %36 : vector<16x128xf32>
    %c3_31 = arith.constant 3 : index
    %c0_32 = arith.constant 0 : index
    %c0_33 = arith.constant 0 : index
    %38 = vector.load %arg4[%c3_31, %c0_32, %c0_33] : memref<8x16x16xf32, #tpu.memory_space<vmem>>, vector<1x16x16xf32>
    %39 = vector.shape_cast %38 : vector<1x16x16xf32> to vector<16x16xf32>
    %40 = arith.addf %37, %19 : vector<16x128xf32>
    %cst_34 = arith.constant dense<0.000000e+00> : vector<16x128xf32>
    %41 = tpu.matmul %39, %40, %cst_34 {dimension_numbers = #tpu.dot_dimension_numbers<[1], [0], [0], [1], [0, 0, 1, 1], [], []>} : vector<16x16xf32>, vector<16x128xf32>, vector<16x128xf32> -> vector<16x128xf32>
    %c4 = arith.constant 4 : index
    %c0_35 = arith.constant 0 : index
    %c0_36 = arith.constant 0 : index
    %42 = vector.load %arg5[%c4, %c0_35, %c0_36] : memref<9x16x1xf32, #tpu.memory_space<vmem>>, vector<1x16x1xf32>
    %43 = vector.shape_cast %42 : vector<1x16x1xf32> to vector<16x1xf32>
    %44 = vector.broadcast %43 : vector<16x1xf32> to vector<16x128xf32>
    %45 = arith.addf %41, %44 : vector<16x128xf32>
    %cst_37 = arith.constant 0.000000e+00 : f32
    %46 = vector.broadcast %cst_37 : f32 to vector<16x128xf32>
    %47 = arith.maximumf %45, %46 : vector<16x128xf32>
    %c4_38 = arith.constant 4 : index
    %c0_39 = arith.constant 0 : index
    %c0_40 = arith.constant 0 : index
    %48 = vector.load %arg4[%c4_38, %c0_39, %c0_40] : memref<8x16x16xf32, #tpu.memory_space<vmem>>, vector<1x16x16xf32>
    %49 = vector.shape_cast %48 : vector<1x16x16xf32> to vector<16x16xf32>
    %50 = arith.addf %47, %10 : vector<16x128xf32>
    %cst_41 = arith.constant dense<0.000000e+00> : vector<16x128xf32>
    %51 = tpu.matmul %49, %50, %cst_41 {dimension_numbers = #tpu.dot_dimension_numbers<[1], [0], [0], [1], [0, 0, 1, 1], [], []>} : vector<16x16xf32>, vector<16x128xf32>, vector<16x128xf32> -> vector<16x128xf32>
    %c5 = arith.constant 5 : index
    %c0_42 = arith.constant 0 : index
    %c0_43 = arith.constant 0 : index
    %52 = vector.load %arg5[%c5, %c0_42, %c0_43] : memref<9x16x1xf32, #tpu.memory_space<vmem>>, vector<1x16x1xf32>
    %53 = vector.shape_cast %52 : vector<1x16x1xf32> to vector<16x1xf32>
    %54 = vector.broadcast %53 : vector<16x1xf32> to vector<16x128xf32>
    %55 = arith.addf %51, %54 : vector<16x128xf32>
    %c5_44 = arith.constant 5 : index
    %c0_45 = arith.constant 0 : index
    %c0_46 = arith.constant 0 : index
    %56 = vector.load %arg4[%c5_44, %c0_45, %c0_46] : memref<8x16x16xf32, #tpu.memory_space<vmem>>, vector<1x16x16xf32>
    %57 = vector.shape_cast %56 : vector<1x16x16xf32> to vector<16x16xf32>
    %cst_47 = arith.constant dense<0.000000e+00> : vector<16x128xf32>
    %58 = tpu.matmul %57, %55, %cst_47 {dimension_numbers = #tpu.dot_dimension_numbers<[1], [0], [0], [1], [0, 0, 1, 1], [], []>} : vector<16x16xf32>, vector<16x128xf32>, vector<16x128xf32> -> vector<16x128xf32>
    %c1_48 = arith.constant 1 : index
    %c0_49 = arith.constant 0 : index
    %c0_50 = arith.constant 0 : index
    %59 = vector.load %arg3[%c1_48, %c0_49, %c0_50] : memref<2x16x12xf32, #tpu.memory_space<vmem>>, vector<1x16x12xf32>
    %60 = vector.shape_cast %59 : vector<1x16x12xf32> to vector<16x12xf32>
    %cst_51 = arith.constant dense<0.000000e+00> : vector<16x128xf32>
    %61 = tpu.matmul %60, %1, %cst_51 {dimension_numbers = #tpu.dot_dimension_numbers<[1], [0], [0], [1], [0, 0, 1, 1], [], []>} : vector<16x12xf32>, vector<12x128xf32>, vector<16x128xf32> -> vector<16x128xf32>
    %62 = arith.addf %58, %61 : vector<16x128xf32>
    %c6 = arith.constant 6 : index
    %c0_52 = arith.constant 0 : index
    %c0_53 = arith.constant 0 : index
    %63 = vector.load %arg5[%c6, %c0_52, %c0_53] : memref<9x16x1xf32, #tpu.memory_space<vmem>>, vector<1x16x1xf32>
    %64 = vector.shape_cast %63 : vector<1x16x1xf32> to vector<16x1xf32>
    %65 = vector.broadcast %64 : vector<16x1xf32> to vector<16x128xf32>
    %66 = arith.addf %62, %65 : vector<16x128xf32>
    %cst_54 = arith.constant 0.000000e+00 : f32
    %67 = vector.broadcast %cst_54 : f32 to vector<16x128xf32>
    %68 = arith.maximumf %66, %67 : vector<16x128xf32>
    %c6_55 = arith.constant 6 : index
    %c0_56 = arith.constant 0 : index
    %c0_57 = arith.constant 0 : index
    %69 = vector.load %arg4[%c6_55, %c0_56, %c0_57] : memref<8x16x16xf32, #tpu.memory_space<vmem>>, vector<1x16x16xf32>
    %70 = vector.shape_cast %69 : vector<1x16x16xf32> to vector<16x16xf32>
    %cst_58 = arith.constant dense<0.000000e+00> : vector<16x128xf32>
    %71 = tpu.matmul %70, %68, %cst_58 {dimension_numbers = #tpu.dot_dimension_numbers<[1], [0], [0], [1], [0, 0, 1, 1], [], []>} : vector<16x16xf32>, vector<16x128xf32>, vector<16x128xf32> -> vector<16x128xf32>
    %c7 = arith.constant 7 : index
    %c0_59 = arith.constant 0 : index
    %c0_60 = arith.constant 0 : index
    %72 = vector.load %arg5[%c7, %c0_59, %c0_60] : memref<9x16x1xf32, #tpu.memory_space<vmem>>, vector<1x16x1xf32>
    %73 = vector.shape_cast %72 : vector<1x16x1xf32> to vector<16x1xf32>
    %74 = vector.broadcast %73 : vector<16x1xf32> to vector<16x128xf32>
    %75 = arith.addf %71, %74 : vector<16x128xf32>
    %cst_61 = arith.constant 0.000000e+00 : f32
    %76 = vector.broadcast %cst_61 : f32 to vector<16x128xf32>
    %77 = arith.maximumf %75, %76 : vector<16x128xf32>
    %c7_62 = arith.constant 7 : index
    %c0_63 = arith.constant 0 : index
    %c0_64 = arith.constant 0 : index
    %78 = vector.load %arg4[%c7_62, %c0_63, %c0_64] : memref<8x16x16xf32, #tpu.memory_space<vmem>>, vector<1x16x16xf32>
    %79 = vector.shape_cast %78 : vector<1x16x16xf32> to vector<16x16xf32>
    %cst_65 = arith.constant dense<0.000000e+00> : vector<16x128xf32>
    %80 = tpu.matmul %79, %77, %cst_65 {dimension_numbers = #tpu.dot_dimension_numbers<[1], [0], [0], [1], [0, 0, 1, 1], [], []>} : vector<16x16xf32>, vector<16x128xf32>, vector<16x128xf32> -> vector<16x128xf32>
    %c8 = arith.constant 8 : index
    %c0_66 = arith.constant 0 : index
    %c0_67 = arith.constant 0 : index
    %81 = vector.load %arg5[%c8, %c0_66, %c0_67] : memref<9x16x1xf32, #tpu.memory_space<vmem>>, vector<1x16x1xf32>
    %82 = vector.shape_cast %81 : vector<1x16x1xf32> to vector<16x1xf32>
    %83 = vector.broadcast %82 : vector<16x1xf32> to vector<16x128xf32>
    %84 = arith.addf %80, %83 : vector<16x128xf32>
    %cst_68 = arith.constant dense<0xFF800000> : vector<128xf32>
    %85 = vector.multi_reduction <maximumf>, %84, %cst_68 [0] : vector<16x128xf32> to vector<128xf32>
    %86 = vector.shape_cast %85 : vector<128xf32> to vector<1x128xf32>
    %87 = vector.broadcast %86 : vector<1x128xf32> to vector<16x128xf32>
    %88 = arith.subf %84, %87 : vector<16x128xf32>
    %89 = math.exp %88 : vector<16x128xf32>
    %cst_69 = arith.constant dense<0.000000e+00> : vector<128xf32>
    %90 = vector.multi_reduction <add>, %89, %cst_69 [0] : vector<16x128xf32> to vector<128xf32>
    %91 = vector.shape_cast %90 : vector<128xf32> to vector<1x128xf32>
    %92 = tpu.reciprocal %91 {approx = true} : vector<1x128xf32> -> vector<1x128xf32>
    %93 = vector.broadcast %92 : vector<1x128xf32> to vector<16x128xf32>
    %94 = arith.mulf %89, %93 : vector<16x128xf32>
    %95 = vector.extract_strided_slice %94 {offsets = [0, 0], sizes = [8, 128], strides = [1, 1]} : vector<16x128xf32> to vector<8x128xf32>
    %c0_70 = arith.constant 0 : index
    %c0_71 = arith.constant 0 : index
    %96 = vector.load %arg6[%c0_70, %c0_71] : memref<8x128xf32, #tpu.memory_space<vmem>>, vector<8x128xf32>
    tpu.vector_store %arg6[%c0_70, %c0_71], %95 {strides = array<i32>} : memref<8x128xf32, #tpu.memory_space<vmem>>, vector<8x128xf32>,
    return
  }
  func.func @transform_0(%arg0: i32) -> (i32, i32) {
    %c0_i32 = arith.constant 0 : i32
    %c0_i32_0 = arith.constant 0 : i32
    return %c0_i32, %arg0 : i32, i32
  }
  func.func @transform_1(%arg0: i32) -> (i32, i32) {
    %c0_i32 = arith.constant 0 : i32
    %c0_i32_0 = arith.constant 0 : i32
    return %c0_i32, %arg0 : i32, i32
  }
  func.func @transform_2(%arg0: i32) -> (i32, i32, i32) {
    %c0_i32 = arith.constant 0 : i32
    %c0_i32_0 = arith.constant 0 : i32
    %c0_i32_1 = arith.constant 0 : i32
    %c0_i32_2 = arith.constant 0 : i32
    return %c0_i32, %c0_i32_0, %c0_i32_1 : i32, i32, i32
  }
  func.func @transform_3(%arg0: i32) -> (i32, i32, i32) {
    %c0_i32 = arith.constant 0 : i32
    %c0_i32_0 = arith.constant 0 : i32
    %c0_i32_1 = arith.constant 0 : i32
    %c0_i32_2 = arith.constant 0 : i32
    return %c0_i32, %c0_i32_0, %c0_i32_1 : i32, i32, i32
  }
  func.func @transform_4(%arg0: i32) -> (i32, i32, i32) {
    %c0_i32 = arith.constant 0 : i32
    %c0_i32_0 = arith.constant 0 : i32
    %c0_i32_1 = arith.constant 0 : i32
    %c0_i32_2 = arith.constant 0 : i32
    return %c0_i32, %c0_i32_0, %c0_i32_1 : i32, i32, i32
  }
  func.func @transform_5(%arg0: i32) -> (i32, i32) {
    %c0_i32 = arith.constant 0 : i32
    %c0_i32_0 = arith.constant 0 : i32
    return %c0_i32, %arg0 : i32, i32
  }
}

</mosaic_0001>

<llo_original>
// kernel: tpu_custom_call.1
$region0: #{tpu_custom_call.1}
  #allocation0 [shape = 'u32[]', space=smem, size = 0x4, offset = 0x4, fixed_abs, tag = 'smem constant byte address 0x4 - core index']
  #allocation1 [shape = 'u32[144,128]{1,0:T(1,128)}', space=vmem, size = 0x12000, scoped, tag = 'internal scratch']
  %s0 = inlined_call_operand.vmem [shape: f32[12,128], index: 0, kind: input, shape index: {}]
  %s1 = inlined_call_operand.vmem [shape: f32[12,128], index: 1, kind: input, shape index: {}]
  %s2 = inlined_call_operand.vmem [shape: f32[2,16,12], index: 2, kind: input, shape index: {}]
  %s3 = inlined_call_operand.vmem [shape: f32[8,16,16], index: 3, kind: input, shape index: {}]
  %s4 = inlined_call_operand.vmem [shape: f32[9,16,1], index: 4, kind: input, shape index: {}]
  %s5 = inlined_call_operand.hbm [shape: f32[8,128], index: 5, kind: output, shape index: {}]
  %s6 = sld [smem:[#allocation0]]
  $region30: #{tpu_custom_call.1} parent=0
    _
  %s8 = ssub.s32 1, %s6
  %s9 = scalar_select 0, %s8, %s6
  $region1: #{tpu_custom_call.1} parent=0
    #allocation2 [shape = 'u8[4096]{0}', space=vmem, size = 0x1000, scoped, tag = 'output window, operand 0, single buffered']
    #allocation3 [shape = 's32[1]{0}', space=sflag, size = 0x4, scoped, tag = 'scoped memory for tpu_custom_call.1']
    %10 = vsyncpa [#allocation3], 0
    // Predicated region
    $region2: #{tpu_custom_call.1} parent=1 // pred_check
      _
    $region3: #{tpu_custom_call.1} parent=1 // pred_check_branch
      %12 = sbr.rel (0) target = $region5
    $region4: #{tpu_custom_call.1} parent=1 // pred_region
      _
    $region5: #{tpu_custom_call.1} parent=1 // pred_fallthru
      _
    // Predicated region
    $region6: #{tpu_custom_call.1} parent=1 // pred_check
      _
    $region7: #{tpu_custom_call.1} parent=1 // pred_check_branch
      %14 = sbr.rel (0) target = $region9
    $region8: #{tpu_custom_call.1} parent=1 // pred_region
      _
    $region9: #{tpu_custom_call.1} parent=1 // pred_fallthru
      _
    // Predicated region
    $region10: #{tpu_custom_call.1} parent=1 // pred_check
      _
    $region11: #{tpu_custom_call.1} parent=1 // pred_check_branch
      %16 = sbr.rel (0) target = $region13
    $region12: #{tpu_custom_call.1} parent=1 // pred_region
      _
    $region13: #{tpu_custom_call.1} parent=1 // pred_fallthru
      _
    // Predicated region
    $region14: #{tpu_custom_call.1} parent=1 // pred_check
      _
    $region15: #{tpu_custom_call.1} parent=1 // pred_check_branch
      %18 = sbr.rel (0) target = $region17
    $region16: #{tpu_custom_call.1} parent=1 // pred_region
      _
    $region17: #{tpu_custom_call.1} parent=1 // pred_fallthru
      _
    // Predicated region
    $region18: #{tpu_custom_call.1} parent=1 // pred_check
      _
    $region19: #{tpu_custom_call.1} parent=1 // pred_check_branch
      %20 = sbr.rel (0) target = $region21
    $region20: #{tpu_custom_call.1} parent=1 // pred_region
      _
    $region21: #{tpu_custom_call.1} parent=1 // pred_fallthru
      _
    %v21 = vld [vmem:[%s0] sm:$0xff]
    %v22 = vld [vmem:[%s0 + $0x8] sm:$0xf]
    %v23 = vld [vmem:[%s1] sm:$0xff]
    %v24 = vld [vmem:[%s1 + $0x8] sm:$0xf]
    %v25 = vld [vmem:[%s2] sm:$0xff]
    %v26 = vld [vmem:[%s2 + $0x8] sm:$0xff]
    %v27 = vld [vmem:[%s4] sm:$0xff]
    %v28 = vld [vmem:[%s4 + $0x8] sm:$0xff]
    %30 = vset.pattern.permute.xlu0 0
    %31 = vperm.xlu0 %30, %v27
    %v32 = vpop.permute.xlu0 %31
    %35 = vset.pattern.permute.xlu0 0
    %36 = vperm.xlu0 %35, %v28
    %v37 = vpop.permute.xlu0 %36
    %vm39 = vcmask 97280
    %v41 = vsel %vm39, %v25, 0
    %v44 = vsel %vm39, %v26, 0
    %vm46 = vcmask 1043456
    %v48 = vsel %vm46, %v22, 0
    %50 = vmatprep.subr.mxu0 0.0
    %51 = vmatpush1.msra.mxu0 %v21
    %52 = vmatprep.subr.mxu0 0.0
    %53 = vmatpush1.msra.mxu0 %v48
    %54 = vmatprep.subr.mxu0 0.0
    %55 = vmatpush1.msra.mxu0 0.0
    %56 = vmatprep.subr.mxu0 0.0
    %57 = vmatpush1.msra.mxu0 0.0
    %58 = vmatprep.subr.mxu0 0.0
    %59 = vmatpush1.msra.mxu0 0.0
    %60 = vmatprep.subr.mxu0 0.0
    %61 = vmatpush1.msra.mxu0 0.0
    %62 = vmatprep.subr.mxu0 0.0
    %63 = vmatpush1.msra.mxu0 0.0
    %64 = vmatprep.subr.mxu0 0.0
    %65 = vmatpush1.msra.mxu0 0.0
    %66 = vmatprep.subr.mxu0 0.0
    %67 = vmatpush1.msra.mxu0 0.0
    %68 = vmatprep.subr.mxu0 0.0
    %69 = vmatpush1.msra.mxu0 0.0
    %70 = vmatprep.subr.mxu0 0.0
    %71 = vmatpush1.msra.mxu0 0.0
    %72 = vmatprep.subr.mxu0 0.0
    %73 = vmatpush1.msra.mxu0 0.0
    %74 = vmatprep.subr.mxu0 0.0
    %75 = vmatpush1.msra.mxu0 0.0
    %76 = vmatprep.subr.mxu0 0.0
    %77 = vmatpush1.msra.mxu0 0.0
    %78 = vmatprep.subr.mxu0 0.0
    %79 = vmatpush1.msra.mxu0 0.0
    %80 = vmatprep.subr.mxu0 0.0
    %81 = vmatpush1.msra.mxu0 0.0
    %82 = vmatprep.subr.mxu0 0.0
    %83 = vmatpush1.msra.mxu0 0.0
    %84 = vmatprep.subr.mxu0 0.0
    %85 = vmatpush1.msra.mxu0 0.0
    %86 = vmatprep.subr.mxu0 0.0
    %87 = vmatpush1.msra.mxu0 0.0
    %88 = vmatprep.subr.mxu0 0.0
    %89 = vmatpush1.msra.mxu0 0.0
    %90 = vmatprep.subr.mxu0 0.0
    %91 = vmatpush1.msra.mxu0 0.0
    %92 = vmatprep.subr.mxu0 0.0
    %93 = vmatpush1.msra.mxu0 0.0
    %94 = vmatprep.subr.mxu0 0.0
    %95 = vmatpush1.msra.mxu0 0.0
    %96 = vmatprep.subr.mxu0 0.0
    %97 = vmatpush1.msra.mxu0 0.0
    %98 = vmatprep.subr.mxu0 0.0
    %99 = vmatpush1.msra.mxu0 0.0
    %100 = vmatprep.subr.mxu0 0.0
    %101 = vmatpush1.msra.mxu0 0.0
    %102 = vmatprep.subr.mxu0 0.0
    %103 = vmatpush1.msra.mxu0 0.0
    %104 = vmatprep.subr.mxu0 0.0
    %105 = vmatpush1.msra.mxu0 0.0
    %106 = vmatprep.subr.mxu0 0.0
    %107 = vmatpush1.msra.mxu0 0.0
    %108 = vmatprep.subr.mxu0 0.0
    %109 = vmatpush1.msra.mxu0 0.0
    %110 = vmatprep.subr.mxu0 0.0
    %111 = vmatpush1.msra.mxu0 0.0
    %112 = vmatprep.subr.mxu0 0.0
    %113 = vmatpush1.msra.mxu0 0.0
    %114 = vmatprep.mubr.f32.mxu0 0.0
    %115 = vmatmul.mubr.f32.gmra.mrb[0].mxu0 %v41
    %v116 = vpop.f32.mrb[0].mxu0
    %v117 = vadd.f32 %v32, %v116
    %v118 = vpop.f32.mrb[0].mxu0
    %119 = vmatprep.mubr.f32.mxu0 0.0
    %120 = vmatmul.mubr.f32.gmra.mrb[0].mxu0 %v44
    %v121 = vpop.f32.mrb[0].mxu0
    %v122 = vadd.f32 %v37, %v121
    %v123 = vpop.f32.mrb[0].mxu0
    %124 = vdwg.mxu0
    %v125 = vmax.f32 %v117, 0.0
    %v126 = vmax.f32 %v122, 0.0
    %v127 = vld [vmem:[%s3] sm:$0xff]
    %v128 = vld [vmem:[%s3 + $0x8] sm:$0xff]
    %s129 = scalar_lea.vmem %s4, 16
    %v130 = vld [vmem:[%s129] sm:$0xff]
    %v131 = vld [vmem:[%s129 + $0x8] sm:$0xff]
    %133 = vset.pattern.permute.xlu0 0
    %134 = vperm.xlu0 %133, %v130
    %v135 = vpop.permute.xlu0 %134
    %138 = vset.pattern.permute.xlu0 0
    %139 = vperm.xlu0 %138, %v131
    %v140 = vpop.permute.xlu0 %139
    %vm142 = vcmask 130048
    %v144 = vsel %vm142, %v127, 0
    %v147 = vsel %vm142, %v128, 0
    %149 = vmatprep.subr.mxu0 0.0
    %150 = vmatpush1.msra.mxu0 %v125
    %151 = vmatprep.subr.mxu0 0.0
    %152 = vmatpush1.msra.mxu0 %v126
    %153 = vmatprep.subr.mxu0 0.0
    %154 = vmatpush1.msra.mxu0 0.0
    %155 = vmatprep.subr.mxu0 0.0
    %156 = vmatpush1.msra.mxu0 0.0
    %157 = vmatprep.subr.mxu0 0.0
    %158 = vmatpush1.msra.mxu0 0.0
    %159 = vmatprep.subr.mxu0 0.0
    %160 = vmatpush1.msra.mxu0 0.0
    %161 = vmatprep.subr.mxu0 0.0
    %162 = vmatpush1.msra.mxu0 0.0
    %163 = vmatprep.subr.mxu0 0.0
    %164 = vmatpush1.msra.mxu0 0.0
    %165 = vmatprep.subr.mxu0 0.0
    %166 = vmatpush1.msra.mxu0 0.0
    %167 = vmatprep.subr.mxu0 0.0
    %168 = vmatpush1.msra.mxu0 0.0
    %169 = vmatprep.subr.mxu0 0.0
    %170 = vmatpush1.msra.mxu0 0.0
    %171 = vmatprep.subr.mxu0 0.0
    %172 = vmatpush1.msra.mxu0 0.0
    %173 = vmatprep.subr.mxu0 0.0
    %174 = vmatpush1.msra.mxu0 0.0
    %175 = vmatprep.subr.mxu0 0.0
    %176 = vmatpush1.msra.mxu0 0.0
    %177 = vmatprep.subr.mxu0 0.0
    %178 = vmatpush1.msra.mxu0 0.0
    %179 = vmatprep.subr.mxu0 0.0
    %180 = vmatpush1.msra.mxu0 0.0
    %181 = vmatprep.subr.mxu0 0.0
    %182 = vmatpush1.msra.mxu0 0.0
    %183 = vmatprep.subr.mxu0 0.0
    %184 = vmatpush1.msra.mxu0 0.0
    %185 = vmatprep.subr.mxu0 0.0
    %186 = vmatpush1.msra.mxu0 0.0
    %187 = vmatprep.subr.mxu0 0.0
    %188 = vmatpush1.msra.mxu0 0.0
    %189 = vmatprep.subr.mxu0 0.0
    %190 = vmatpush1.msra.mxu0 0.0
    %191 = vmatprep.subr.mxu0 0.0
    %192 = vmatpush1.msra.mxu0 0.0
    %193 = vmatprep.subr.mxu0 0.0
    %194 = vmatpush1.msra.mxu0 0.0
    %195 = vmatprep.subr.mxu0 0.0
    %196 = vmatpush1.msra.mxu0 0.0
    %197 = vmatprep.subr.mxu0 0.0
    %198 = vmatpush1.msra.mxu0 0.0
    %199 = vmatprep.subr.mxu0 0.0
    %200 = vmatpush1.msra.mxu0 0.0
    %201 = vmatprep.subr.mxu0 0.0
    %202 = vmatpush1.msra.mxu0 0.0
    %203 = vmatprep.subr.mxu0 0.0
    %204 = vmatpush1.msra.mxu0 0.0
    %205 = vmatprep.subr.mxu0 0.0
    %206 = vmatpush1.msra.mxu0 0.0
    %207 = vmatprep.subr.mxu0 0.0
    %208 = vmatpush1.msra.mxu0 0.0
    %209 = vmatprep.subr.mxu0 0.0
    %210 = vmatpush1.msra.mxu0 0.0
    %211 = vmatprep.subr.mxu0 0.0
    %212 = vmatpush1.msra.mxu0 0.0
    %213 = vmatprep.mubr.f32.mxu0 0.0
    %214 = vmatmul.mubr.f32.gmra.mrb[0].mxu0 %v144
    %v215 = vpop.f32.mrb[0].mxu0
    %v216 = vadd.f32 %v135, %v215
    %v217 = vpop.f32.mrb[0].mxu0
    %218 = vmatprep.mubr.f32.mxu0 0.0
    %219 = vmatmul.mubr.f32.gmra.mrb[0].mxu0 %v147
    %v220 = vpop.f32.mrb[0].mxu0
    %v221 = vadd.f32 %v140, %v220
    %v222 = vpop.f32.mrb[0].mxu0
    %223 = vdwg.mxu0
    %v224 = vmax.f32 %v216, 0.0
    %v225 = vmax.f32 %v221, 0.0
    %s226 = scalar_lea.vmem %s3, 16
    %v227 = vld [vmem:[%s226] sm:$0xff]
    %v228 = vld [vmem:[%s226 + $0x8] sm:$0xff]
    %s229 = scalar_lea.vmem %s4, 32
    %v230 = vld [vmem:[%s229] sm:$0xff]
    %v231 = vld [vmem:[%s229 + $0x8] sm:$0xff]
    %233 = vset.pattern.permute.xlu0 0
    %234 = vperm.xlu0 %233, %v230
    %v235 = vpop.permute.xlu0 %234
    %238 = vset.pattern.permute.xlu0 0
    %239 = vperm.xlu0 %238, %v231
    %v240 = vpop.permute.xlu0 %239
    %v243 = vsel %vm142, %v227, 0
    %v246 = vsel %vm142, %v228, 0
    %248 = vmatprep.subr.mxu0 0.0
    %249 = vmatpush1.msra.mxu0 %v224
    %250 = vmatprep.subr.mxu0 0.0
    %251 = vmatpush1.msra.mxu0 %v225
    %252 = vmatprep.subr.mxu0 0.0
    %253 = vmatpush1.msra.mxu0 0.0
    %254 = vmatprep.subr.mxu0 0.0
    %255 = vmatpush1.msra.mxu0 0.0
    %256 = vmatprep.subr.mxu0 0.0
    %257 = vmatpush1.msra.mxu0 0.0
    %258 = vmatprep.subr.mxu0 0.0
    %259 = vmatpush1.msra.mxu0 0.0
    %260 = vmatprep.subr.mxu0 0.0
    %261 = vmatpush1.msra.mxu0 0.0
    %262 = vmatprep.subr.mxu0 0.0
    %263 = vmatpush1.msra.mxu0 0.0
    %264 = vmatprep.subr.mxu0 0.0
    %265 = vmatpush1.msra.mxu0 0.0
    %266 = vmatprep.subr.mxu0 0.0
    %267 = vmatpush1.msra.mxu0 0.0
    %268 = vmatprep.subr.mxu0 0.0
    %269 = vmatpush1.msra.mxu0 0.0
    %270 = vmatprep.subr.mxu0 0.0
    %271 = vmatpush1.msra.mxu0 0.0
    %272 = vmatprep.subr.mxu0 0.0
    %273 = vmatpush1.msra.mxu0 0.0
    %274 = vmatprep.subr.mxu0 0.0
    %275 = vmatpush1.msra.mxu0 0.0
    %276 = vmatprep.subr.mxu0 0.0
    %277 = vmatpush1.msra.mxu0 0.0
    %278 = vmatprep.subr.mxu0 0.0
    %279 = vmatpush1.msra.mxu0 0.0
    %280 = vmatprep.subr.mxu0 0.0
    %281 = vmatpush1.msra.mxu0 0.0
    %282 = vmatprep.subr.mxu0 0.0
    %283 = vmatpush1.msra.mxu0 0.0
    %284 = vmatprep.subr.mxu0 0.0
    %285 = vmatpush1.msra.mxu0 0.0
    %286 = vmatprep.subr.mxu0 0.0
    %287 = vmatpush1.msra.mxu0 0.0
    %288 = vmatprep.subr.mxu0 0.0
    %289 = vmatpush1.msra.mxu0 0.0
    %290 = vmatprep.subr.mxu0 0.0
    %291 = vmatpush1.msra.mxu0 0.0
    %292 = vmatprep.subr.mxu0 0.0
    %293 = vmatpush1.msra.mxu0 0.0
    %294 = vmatprep.subr.mxu0 0.0
    %295 = vmatpush1.msra.mxu0 0.0
    %296 = vmatprep.subr.mxu0 0.0
    %297 = vmatpush1.msra.mxu0 0.0
    %298 = vmatprep.subr.mxu0 0.0
    %299 = vmatpush1.msra.mxu0 0.0
    %300 = vmatprep.subr.mxu0 0.0
    %301 = vmatpush1.msra.mxu0 0.0
    %302 = vmatprep.subr.mxu0 0.0
    %303 = vmatpush1.msra.mxu0 0.0
    %304 = vmatprep.subr.mxu0 0.0
    %305 = vmatpush1.msra.mxu0 0.0
    %306 = vmatprep.subr.mxu0 0.0
    %307 = vmatpush1.msra.mxu0 0.0
    %308 = vmatprep.subr.mxu0 0.0
    %309 = vmatpush1.msra.mxu0 0.0
    %310 = vmatprep.subr.mxu0 0.0
    %311 = vmatpush1.msra.mxu0 0.0
    %312 = vmatprep.mubr.f32.mxu0 0.0
    %313 = vmatmul.mubr.f32.gmra.mrb[0].mxu0 %v243
    %v314 = vpop.f32.mrb[0].mxu0
    %v315 = vadd.f32 %v235, %v314
    %v316 = vpop.f32.mrb[0].mxu0
    %317 = vmatprep.mubr.f32.mxu0 0.0
    %318 = vmatmul.mubr.f32.gmra.mrb[0].mxu0 %v246
    %v319 = vpop.f32.mrb[0].mxu0
    %v320 = vadd.f32 %v240, %v319
    %v321 = vpop.f32.mrb[0].mxu0
    %322 = vdwg.mxu0
    %v323 = vmax.f32 %v315, 0.0
    %v324 = vmax.f32 %v320, 0.0
    %s325 = scalar_lea.vmem %s3, 32
    %v326 = vld [vmem:[%s325] sm:$0xff]
    %v327 = vld [vmem:[%s325 + $0x8] sm:$0xff]
    %s328 = scalar_lea.vmem %s4, 48
    %v329 = vld [vmem:[%s328] sm:$0xff]
    %v330 = vld [vmem:[%s328 + $0x8] sm:$0xff]
    %332 = vset.pattern.permute.xlu0 0
    %333 = vperm.xlu0 %332, %v329
    %v334 = vpop.permute.xlu0 %333
    %337 = vset.pattern.permute.xlu0 0
    %338 = vperm.xlu0 %337, %v330
    %v339 = vpop.permute.xlu0 %338
    %v342 = vsel %vm142, %v326, 0
    %v345 = vsel %vm142, %v327, 0
    %347 = vmatprep.subr.mxu0 0.0
    %348 = vmatpush1.msra.mxu0 %v323
    %349 = vmatprep.subr.mxu0 0.0
    %350 = vmatpush1.msra.mxu0 %v324
    %351 = vmatprep.subr.mxu0 0.0
    %352 = vmatpush1.msra.mxu0 0.0
    %353 = vmatprep.subr.mxu0 0.0
    %354 = vmatpush1.msra.mxu0 0.0
    %355 = vmatprep.subr.mxu0 0.0
    %356 = vmatpush1.msra.mxu0 0.0
    %357 = vmatprep.subr.mxu0 0.0
    %358 = vmatpush1.msra.mxu0 0.0
    %359 = vmatprep.subr.mxu0 0.0
    %360 = vmatpush1.msra.mxu0 0.0
    %361 = vmatprep.subr.mxu0 0.0
    %362 = vmatpush1.msra.mxu0 0.0
    %363 = vmatprep.subr.mxu0 0.0
    %364 = vmatpush1.msra.mxu0 0.0
    %365 = vmatprep.subr.mxu0 0.0
    %366 = vmatpush1.msra.mxu0 0.0
    %367 = vmatprep.subr.mxu0 0.0
    %368 = vmatpush1.msra.mxu0 0.0
    %369 = vmatprep.subr.mxu0 0.0
    %370 = vmatpush1.msra.mxu0 0.0
    %371 = vmatprep.subr.mxu0 0.0
    %372 = vmatpush1.msra.mxu0 0.0
    %373 = vmatprep.subr.mxu0 0.0
    %374 = vmatpush1.msra.mxu0 0.0
    %375 = vmatprep.subr.mxu0 0.0
    %376 = vmatpush1.msra.mxu0 0.0
    %377 = vmatprep.subr.mxu0 0.0
    %378 = vmatpush1.msra.mxu0 0.0
    %379 = vmatprep.subr.mxu0 0.0
    %380 = vmatpush1.msra.mxu0 0.0
    %381 = vmatprep.subr.mxu0 0.0
    %382 = vmatpush1.msra.mxu0 0.0
    %383 = vmatprep.subr.mxu0 0.0
    %384 = vmatpush1.msra.mxu0 0.0
    %385 = vmatprep.subr.mxu0 0.0
    %386 = vmatpush1.msra.mxu0 0.0
    %387 = vmatprep.subr.mxu0 0.0
    %388 = vmatpush1.msra.mxu0 0.0
    %389 = vmatprep.subr.mxu0 0.0
    %390 = vmatpush1.msra.mxu0 0.0
    %391 = vmatprep.subr.mxu0 0.0
    %392 = vmatpush1.msra.mxu0 0.0
    %393 = vmatprep.subr.mxu0 0.0
    %394 = vmatpush1.msra.mxu0 0.0
    %395 = vmatprep.subr.mxu0 0.0
    %396 = vmatpush1.msra.mxu0 0.0
    %397 = vmatprep.subr.mxu0 0.0
    %398 = vmatpush1.msra.mxu0 0.0
    %399 = vmatprep.subr.mxu0 0.0
    %400 = vmatpush1.msra.mxu0 0.0
    %401 = vmatprep.subr.mxu0 0.0
    %402 = vmatpush1.msra.mxu0 0.0
    %403 = vmatprep.subr.mxu0 0.0
    %404 = vmatpush1.msra.mxu0 0.0
    %405 = vmatprep.subr.mxu0 0.0
    %406 = vmatpush1.msra.mxu0 0.0
    %407 = vmatprep.subr.mxu0 0.0
    %408 = vmatpush1.msra.mxu0 0.0
    %409 = vmatprep.subr.mxu0 0.0
    %410 = vmatpush1.msra.mxu0 0.0
    %411 = vmatprep.mubr.f32.mxu0 0.0
    %412 = vmatmul.mubr.f32.gmra.mrb[0].mxu0 %v342
    %v413 = vpop.f32.mrb[0].mxu0
    %v414 = vadd.f32 %v334, %v413
    %v415 = vpop.f32.mrb[0].mxu0
    %416 = vmatprep.mubr.f32.mxu0 0.0
    %417 = vmatmul.mubr.f32.gmra.mrb[0].mxu0 %v345
    %v418 = vpop.f32.mrb[0].mxu0
    %v419 = vadd.f32 %v339, %v418
    %v420 = vpop.f32.mrb[0].mxu0
    %421 = vdwg.mxu0
    %v422 = vmax.f32 %v414, 0.0
    %v423 = vmax.f32 %v419, 0.0
    %s424 = scalar_lea.vmem %s3, 48
    %v425 = vld [vmem:[%s424] sm:$0xff]
    %v426 = vld [vmem:[%s424 + $0x8] sm:$0xff]
    %v427 = vadd.f32 %v422, %v224
    %v428 = vadd.f32 %v423, %v225
    %s429 = scalar_lea.vmem %s4, 64
    %v430 = vld [vmem:[%s429] sm:$0xff]
    %v431 = vld [vmem:[%s429 + $0x8] sm:$0xff]
    %433 = vset.pattern.permute.xlu0 0
    %434 = vperm.xlu0 %433, %v430
    %v435 = vpop.permute.xlu0 %434
    %438 = vset.pattern.permute.xlu0 0
    %439 = vperm.xlu0 %438, %v431
    %v440 = vpop.permute.xlu0 %439
    %v443 = vsel %vm142, %v425, 0
    %v446 = vsel %vm142, %v426, 0
    %448 = vmatprep.subr.mxu0 0.0
    %449 = vmatpush1.msra.mxu0 %v427
    %450 = vmatprep.subr.mxu0 0.0
    %451 = vmatpush1.msra.mxu0 %v428
    %452 = vmatprep.subr.mxu0 0.0
    %453 = vmatpush1.msra.mxu0 0.0
    %454 = vmatprep.subr.mxu0 0.0
    %455 = vmatpush1.msra.mxu0 0.0
    %456 = vmatprep.subr.mxu0 0.0
    %457 = vmatpush1.msra.mxu0 0.0
    %458 = vmatprep.subr.mxu0 0.0
    %459 = vmatpush1.msra.mxu0 0.0
    %460 = vmatprep.subr.mxu0 0.0
    %461 = vmatpush1.msra.mxu0 0.0
    %462 = vmatprep.subr.mxu0 0.0
    %463 = vmatpush1.msra.mxu0 0.0
    %464 = vmatprep.subr.mxu0 0.0
    %465 = vmatpush1.msra.mxu0 0.0
    %466 = vmatprep.subr.mxu0 0.0
    %467 = vmatpush1.msra.mxu0 0.0
    %468 = vmatprep.subr.mxu0 0.0
    %469 = vmatpush1.msra.mxu0 0.0
    %470 = vmatprep.subr.mxu0 0.0
    %471 = vmatpush1.msra.mxu0 0.0
    %472 = vmatprep.subr.mxu0 0.0
    %473 = vmatpush1.msra.mxu0 0.0
    %474 = vmatprep.subr.mxu0 0.0
    %475 = vmatpush1.msra.mxu0 0.0
    %476 = vmatprep.subr.mxu0 0.0
    %477 = vmatpush1.msra.mxu0 0.0
    %478 = vmatprep.subr.mxu0 0.0
    %479 = vmatpush1.msra.mxu0 0.0
    %480 = vmatprep.subr.mxu0 0.0
    %481 = vmatpush1.msra.mxu0 0.0
    %482 = vmatprep.subr.mxu0 0.0
    %483 = vmatpush1.msra.mxu0 0.0
    %484 = vmatprep.subr.mxu0 0.0
    %485 = vmatpush1.msra.mxu0 0.0
    %486 = vmatprep.subr.mxu0 0.0
    %487 = vmatpush1.msra.mxu0 0.0
    %488 = vmatprep.subr.mxu0 0.0
    %489 = vmatpush1.msra.mxu0 0.0
    %490 = vmatprep.subr.mxu0 0.0
    %491 = vmatpush1.msra.mxu0 0.0
    %492 = vmatprep.subr.mxu0 0.0
    %493 = vmatpush1.msra.mxu0 0.0
    %494 = vmatprep.subr.mxu0 0.0
    %495 = vmatpush1.msra.mxu0 0.0
    %496 = vmatprep.subr.mxu0 0.0
    %497 = vmatpush1.msra.mxu0 0.0
    %498 = vmatprep.subr.mxu0 0.0
    %499 = vmatpush1.msra.mxu0 0.0
    %500 = vmatprep.subr.mxu0 0.0
    %501 = vmatpush1.msra.mxu0 0.0
    %502 = vmatprep.subr.mxu0 0.0
    %503 = vmatpush1.msra.mxu0 0.0
    %504 = vmatprep.subr.mxu0 0.0
    %505 = vmatpush1.msra.mxu0 0.0
    %506 = vmatprep.subr.mxu0 0.0
    %507 = vmatpush1.msra.mxu0 0.0
    %508 = vmatprep.subr.mxu0 0.0
    %509 = vmatpush1.msra.mxu0 0.0
    %510 = vmatprep.subr.mxu0 0.0
    %511 = vmatpush1.msra.mxu0 0.0
    %512 = vmatprep.mubr.f32.mxu0 0.0
    %513 = vmatmul.mubr.f32.gmra.mrb[0].mxu0 %v443
    %v514 = vpop.f32.mrb[0].mxu0
    %v515 = vadd.f32 %v435, %v514
    %v516 = vpop.f32.mrb[0].mxu0
    %517 = vmatprep.mubr.f32.mxu0 0.0
    %518 = vmatmul.mubr.f32.gmra.mrb[0].mxu0 %v446
    %v519 = vpop.f32.mrb[0].mxu0
    %v520 = vadd.f32 %v440, %v519
    %v521 = vpop.f32.mrb[0].mxu0
    %522 = vdwg.mxu0
    %v523 = vmax.f32 %v515, 0.0
    %v524 = vmax.f32 %v520, 0.0
    %s525 = scalar_lea.vmem %s3, 64
    %v526 = vld [vmem:[%s525] sm:$0xff]
    %v527 = vld [vmem:[%s525 + $0x8] sm:$0xff]
    %v528 = vadd.f32 %v523, %v125
    %v529 = vadd.f32 %v524, %v126
    %s530 = scalar_lea.vmem %s4, 80
    %v531 = vld [vmem:[%s530] sm:$0xff]
    %v532 = vld [vmem:[%s530 + $0x8] sm:$0xff]
    %534 = vset.pattern.permute.xlu0 0
    %535 = vperm.xlu0 %534, %v531
    %v536 = vpop.permute.xlu0 %535
    %539 = vset.pattern.permute.xlu0 0
    %540 = vperm.xlu0 %539, %v532
    %v541 = vpop.permute.xlu0 %540
    %v544 = vsel %vm142, %v526, 0
    %v547 = vsel %vm142, %v527, 0
    %549 = vmatprep.subr.mxu0 0.0
    %550 = vmatpush1.msra.mxu0 %v528
    %551 = vmatprep.subr.mxu0 0.0
    %552 = vmatpush1.msra.mxu0 %v529
    %553 = vmatprep.subr.mxu0 0.0
    %554 = vmatpush1.msra.mxu0 0.0
    %555 = vmatprep.subr.mxu0 0.0
    %556 = vmatpush1.msra.mxu0 0.0
    %557 = vmatprep.subr.mxu0 0.0
    %558 = vmatpush1.msra.mxu0 0.0
    %559 = vmatprep.subr.mxu0 0.0
    %560 = vmatpush1.msra.mxu0 0.0
    %561 = vmatprep.subr.mxu0 0.0
    %562 = vmatpush1.msra.mxu0 0.0
    %563 = vmatprep.subr.mxu0 0.0
    %564 = vmatpush1.msra.mxu0 0.0
    %565 = vmatprep.subr.mxu0 0.0
    %566 = vmatpush1.msra.mxu0 0.0
    %567 = vmatprep.subr.mxu0 0.0
    %568 = vmatpush1.msra.mxu0 0.0
    %569 = vmatprep.subr.mxu0 0.0
    %570 = vmatpush1.msra.mxu0 0.0
    %571 = vmatprep.subr.mxu0 0.0
    %572 = vmatpush1.msra.mxu0 0.0
    %573 = vmatprep.subr.mxu0 0.0
    %574 = vmatpush1.msra.mxu0 0.0
    %575 = vmatprep.subr.mxu0 0.0
    %576 = vmatpush1.msra.mxu0 0.0
    %577 = vmatprep.subr.mxu0 0.0
    %578 = vmatpush1.msra.mxu0 0.0
    %579 = vmatprep.subr.mxu0 0.0
    %580 = vmatpush1.msra.mxu0 0.0
    %581 = vmatprep.subr.mxu0 0.0
    %582 = vmatpush1.msra.mxu0 0.0
    %583 = vmatprep.subr.mxu0 0.0
    %584 = vmatpush1.msra.mxu0 0.0
    %585 = vmatprep.subr.mxu0 0.0
    %586 = vmatpush1.msra.mxu0 0.0
    %587 = vmatprep.subr.mxu0 0.0
    %588 = vmatpush1.msra.mxu0 0.0
    %589 = vmatprep.subr.mxu0 0.0
    %590 = vmatpush1.msra.mxu0 0.0
    %591 = vmatprep.subr.mxu0 0.0
    %592 = vmatpush1.msra.mxu0 0.0
    %593 = vmatprep.subr.mxu0 0.0
    %594 = vmatpush1.msra.mxu0 0.0
    %595 = vmatprep.subr.mxu0 0.0
    %596 = vmatpush1.msra.mxu0 0.0
    %597 = vmatprep.subr.mxu0 0.0
    %598 = vmatpush1.msra.mxu0 0.0
    %599 = vmatprep.subr.mxu0 0.0
    %600 = vmatpush1.msra.mxu0 0.0
    %601 = vmatprep.subr.mxu0 0.0
    %602 = vmatpush1.msra.mxu0 0.0
    %603 = vmatprep.subr.mxu0 0.0
    %604 = vmatpush1.msra.mxu0 0.0
    %605 = vmatprep.subr.mxu0 0.0
    %606 = vmatpush1.msra.mxu0 0.0
    %607 = vmatprep.subr.mxu0 0.0
    %608 = vmatpush1.msra.mxu0 0.0
    %609 = vmatprep.subr.mxu0 0.0
    %610 = vmatpush1.msra.mxu0 0.0
    %611 = vmatprep.subr.mxu0 0.0
    %612 = vmatpush1.msra.mxu0 0.0
    %613 = vmatprep.mubr.f32.mxu0 0.0
    %614 = vmatmul.mubr.f32.gmra.mrb[0].mxu0 %v544
    %v615 = vpop.f32.mrb[0].mxu0
    %v616 = vadd.f32 %v536, %v615
    %v617 = vpop.f32.mrb[0].mxu0
    %618 = vmatprep.mubr.f32.mxu0 0.0
    %619 = vmatmul.mubr.f32.gmra.mrb[0].mxu0 %v547
    %v620 = vpop.f32.mrb[0].mxu0
    %v621 = vadd.f32 %v541, %v620
    %v622 = vpop.f32.mrb[0].mxu0
    %623 = vdwg.mxu0
    %s624 = scalar_lea.vmem %s3, 80
    %v625 = vld [vmem:[%s624] sm:$0xff]
    %v626 = vld [vmem:[%s624 + $0x8] sm:$0xff]
    %s627 = scalar_lea.vmem %s2, 16
    %v628 = vld [vmem:[%s627] sm:$0xff]
    %v629 = vld [vmem:[%s627 + $0x8] sm:$0xff]
    %v631 = vsel %vm39, %v628, 0
    %v634 = vsel %vm39, %v629, 0
    %v637 = vsel %vm46, %v24, 0
    %639 = vmatprep.subr.mxu0 0.0
    %640 = vmatpush1.msra.mxu0 %v23
    %641 = vmatprep.subr.mxu0 0.0
    %642 = vmatpush1.msra.mxu0 %v637
    %643 = vmatprep.subr.mxu0 0.0
    %644 = vmatpush1.msra.mxu0 0.0
    %645 = vmatprep.subr.mxu0 0.0
    %646 = vmatpush1.msra.mxu0 0.0
    %647 = vmatprep.subr.mxu0 0.0
    %648 = vmatpush1.msra.mxu0 0.0
    %649 = vmatprep.subr.mxu0 0.0
    %650 = vmatpush1.msra.mxu0 0.0
    %651 = vmatprep.subr.mxu0 0.0
    %652 = vmatpush1.msra.mxu0 0.0
    %653 = vmatprep.subr.mxu0 0.0
    %654 = vmatpush1.msra.mxu0 0.0
    %655 = vmatprep.subr.mxu0 0.0
    %656 = vmatpush1.msra.mxu0 0.0
    %657 = vmatprep.subr.mxu0 0.0
    %658 = vmatpush1.msra.mxu0 0.0
    %659 = vmatprep.subr.mxu0 0.0
    %660 = vmatpush1.msra.mxu0 0.0
    %661 = vmatprep.subr.mxu0 0.0
    %662 = vmatpush1.msra.mxu0 0.0
    %663 = vmatprep.subr.mxu0 0.0
    %664 = vmatpush1.msra.mxu0 0.0
    %665 = vmatprep.subr.mxu0 0.0
    %666 = vmatpush1.msra.mxu0 0.0
    %667 = vmatprep.subr.mxu0 0.0
    %668 = vmatpush1.msra.mxu0 0.0
    %669 = vmatprep.subr.mxu0 0.0
    %670 = vmatpush1.msra.mxu0 0.0
    %671 = vmatprep.subr.mxu0 0.0
    %672 = vmatpush1.msra.mxu0 0.0
    %673 = vmatprep.subr.mxu0 0.0
    %674 = vmatpush1.msra.mxu0 0.0
    %675 = vmatprep.subr.mxu0 0.0
    %676 = vmatpush1.msra.mxu0 0.0
    %677 = vmatprep.subr.mxu0 0.0
    %678 = vmatpush1.msra.mxu0 0.0
    %679 = vmatprep.subr.mxu0 0.0
    %680 = vmatpush1.msra.mxu0 0.0
    %681 = vmatprep.subr.mxu0 0.0
    %682 = vmatpush1.msra.mxu0 0.0
    %683 = vmatprep.subr.mxu0 0.0
    %684 = vmatpush1.msra.mxu0 0.0
    %685 = vmatprep.subr.mxu0 0.0
    %686 = vmatpush1.msra.mxu0 0.0
    %687 = vmatprep.subr.mxu0 0.0
    %688 = vmatpush1.msra.mxu0 0.0
    %689 = vmatprep.subr.mxu0 0.0
    %690 = vmatpush1.msra.mxu0 0.0
    %691 = vmatprep.subr.mxu0 0.0
    %692 = vmatpush1.msra.mxu0 0.0
    %693 = vmatprep.subr.mxu0 0.0
    %694 = vmatpush1.msra.mxu0 0.0
    %695 = vmatprep.subr.mxu0 0.0
    %696 = vmatpush1.msra.mxu0 0.0
    %697 = vmatprep.subr.mxu0 0.0
    %698 = vmatpush1.msra.mxu0 0.0
    %699 = vmatprep.subr.mxu0 0.0
    %700 = vmatpush1.msra.mxu0 0.0
    %701 = vmatprep.subr.mxu0 0.0
    %702 = vmatpush1.msra.mxu0 0.0
    %703 = vmatprep.mubr.f32.mxu0 0.0
    %704 = vmatmul.mubr.f32.gmra.mrb[0].mxu0 %v631
    %v705 = vpop.f32.mrb[0].mxu0
    %v706 = vadd.f32 0.0, %v705
    %v707 = vpop.f32.mrb[0].mxu0
    %708 = vmatprep.mubr.f32.mxu0 0.0
    %709 = vmatmul.mubr.f32.gmra.mrb[0].mxu0 %v634
    %v710 = vpop.f32.mrb[0].mxu0
    %v711 = vadd.f32 0.0, %v710
    %v712 = vpop.f32.mrb[0].mxu0
    %713 = vdwg.mxu0
    %v715 = vsel %vm142, %v625, 0
    %v718 = vsel %vm142, %v626, 0
    %720 = vmatprep.subr.mxu0 0.0
    %721 = vmatpush1.msra.mxu0 %v616
    %722 = vmatprep.subr.mxu0 0.0
    %723 = vmatpush1.msra.mxu0 %v621
    %724 = vmatprep.subr.mxu0 0.0
    %725 = vmatpush1.msra.mxu0 0.0
    %726 = vmatprep.subr.mxu0 0.0
    %727 = vmatpush1.msra.mxu0 0.0
    %728 = vmatprep.subr.mxu0 0.0
    %729 = vmatpush1.msra.mxu0 0.0
    %730 = vmatprep.subr.mxu0 0.0
    %731 = vmatpush1.msra.mxu0 0.0
    %732 = vmatprep.subr.mxu0 0.0
    %733 = vmatpush1.msra.mxu0 0.0
    %734 = vmatprep.subr.mxu0 0.0
    %735 = vmatpush1.msra.mxu0 0.0
    %736 = vmatprep.subr.mxu0 0.0
    %737 = vmatpush1.msra.mxu0 0.0
    %738 = vmatprep.subr.mxu0 0.0
    %739 = vmatpush1.msra.mxu0 0.0
    %740 = vmatprep.subr.mxu0 0.0
    %741 = vmatpush1.msra.mxu0 0.0
    %742 = vmatprep.subr.mxu0 0.0
    %743 = vmatpush1.msra.mxu0 0.0
    %744 = vmatprep.subr.mxu0 0.0
    %745 = vmatpush1.msra.mxu0 0.0
    %746 = vmatprep.subr.mxu0 0.0
    %747 = vmatpush1.msra.mxu0 0.0
    %748 = vmatprep.subr.mxu0 0.0
    %749 = vmatpush1.msra.mxu0 0.0
    %750 = vmatprep.subr.mxu0 0.0
    %751 = vmatpush1.msra.mxu0 0.0
    %752 = vmatprep.subr.mxu0 0.0
    %753 = vmatpush1.msra.mxu0 0.0
    %754 = vmatprep.subr.mxu0 0.0
    %755 = vmatpush1.msra.mxu0 0.0
    %756 = vmatprep.subr.mxu0 0.0
    %757 = vmatpush1.msra.mxu0 0.0
    %758 = vmatprep.subr.mxu0 0.0
    %759 = vmatpush1.msra.mxu0 0.0
    %760 = vmatprep.subr.mxu0 0.0
    %761 = vmatpush1.msra.mxu0 0.0
    %762 = vmatprep.subr.mxu0 0.0
    %763 = vmatpush1.msra.mxu0 0.0
    %764 = vmatprep.subr.mxu0 0.0
    %765 = vmatpush1.msra.mxu0 0.0
    %766 = vmatprep.subr.mxu0 0.0
    %767 = vmatpush1.msra.mxu0 0.0
    %768 = vmatprep.subr.mxu0 0.0
    %769 = vmatpush1.msra.mxu0 0.0
    %770 = vmatprep.subr.mxu0 0.0
    %771 = vmatpush1.msra.mxu0 0.0
    %772 = vmatprep.subr.mxu0 0.0
    %773 = vmatpush1.msra.mxu0 0.0
    %774 = vmatprep.subr.mxu0 0.0
    %775 = vmatpush1.msra.mxu0 0.0
    %776 = vmatprep.subr.mxu0 0.0
    %777 = vmatpush1.msra.mxu0 0.0
    %778 = vmatprep.subr.mxu0 0.0
    %779 = vmatpush1.msra.mxu0 0.0
    %780 = vmatprep.subr.mxu0 0.0
    %781 = vmatpush1.msra.mxu0 0.0
    %782 = vmatprep.subr.mxu0 0.0
    %783 = vmatpush1.msra.mxu0 0.0
    %784 = vmatprep.mubr.f32.mxu0 0.0
    %785 = vmatmul.mubr.f32.gmra.mrb[0].mxu0 %v715
    %v786 = vpop.f32.mrb[0].mxu0
    %v787 = vadd.f32 %v706, %v786
    %v788 = vpop.f32.mrb[0].mxu0
    %789 = vmatprep.mubr.f32.mxu0 0.0
    %790 = vmatmul.mubr.f32.gmra.mrb[0].mxu0 %v718
    %v791 = vpop.f32.mrb[0].mxu0
    %v792 = vadd.f32 %v711, %v791
    %v793 = vpop.f32.mrb[0].mxu0
    %794 = vdwg.mxu0
    %s795 = scalar_lea.vmem %s4, 96
    %v796 = vld [vmem:[%s795] sm:$0xff]
    %v797 = vld [vmem:[%s795 + $0x8] sm:$0xff]
    %799 = vset.pattern.permute.xlu0 0
    %800 = vperm.xlu0 %799, %v796
    %v801 = vpop.permute.xlu0 %800
    %804 = vset.pattern.permute.xlu0 0
    %805 = vperm.xlu0 %804, %v797
    %v806 = vpop.permute.xlu0 %805
    %v808 = vadd.f32 %v787, %v801
    %v809 = vadd.f32 %v792, %v806
    %v810 = vmax.f32 %v808, 0.0
    %v811 = vmax.f32 %v809, 0.0
    %s812 = scalar_lea.vmem %s3, 96
    %v813 = vld [vmem:[%s812] sm:$0xff]
    %v814 = vld [vmem:[%s812 + $0x8] sm:$0xff]
    %s815 = scalar_lea.vmem %s4, 112
    %v816 = vld [vmem:[%s815] sm:$0xff]
    %v817 = vld [vmem:[%s815 + $0x8] sm:$0xff]
    %819 = vset.pattern.permute.xlu0 0
    %820 = vperm.xlu0 %819, %v816
    %v821 = vpop.permute.xlu0 %820
    %824 = vset.pattern.permute.xlu0 0
    %825 = vperm.xlu0 %824, %v817
    %v826 = vpop.permute.xlu0 %825
    %v829 = vsel %vm142, %v813, 0
    %v832 = vsel %vm142, %v814, 0
    %834 = vmatprep.subr.mxu0 0.0
    %835 = vmatpush1.msra.mxu0 %v810
    %836 = vmatprep.subr.mxu0 0.0
    %837 = vmatpush1.msra.mxu0 %v811
    %838 = vmatprep.subr.mxu0 0.0
    %839 = vmatpush1.msra.mxu0 0.0
    %840 = vmatprep.subr.mxu0 0.0
    %841 = vmatpush1.msra.mxu0 0.0
    %842 = vmatprep.subr.mxu0 0.0
    %843 = vmatpush1.msra.mxu0 0.0
    %844 = vmatprep.subr.mxu0 0.0
    %845 = vmatpush1.msra.mxu0 0.0
    %846 = vmatprep.subr.mxu0 0.0
    %847 = vmatpush1.msra.mxu0 0.0
    %848 = vmatprep.subr.mxu0 0.0
    %849 = vmatpush1.msra.mxu0 0.0
    %850 = vmatprep.subr.mxu0 0.0
    %851 = vmatpush1.msra.mxu0 0.0
    %852 = vmatprep.subr.mxu0 0.0
    %853 = vmatpush1.msra.mxu0 0.0
    %854 = vmatprep.subr.mxu0 0.0
    %855 = vmatpush1.msra.mxu0 0.0
    %856 = vmatprep.subr.mxu0 0.0
    %857 = vmatpush1.msra.mxu0 0.0
    %858 = vmatprep.subr.mxu0 0.0
    %859 = vmatpush1.msra.mxu0 0.0
    %860 = vmatprep.subr.mxu0 0.0
    %861 = vmatpush1.msra.mxu0 0.0
    %862 = vmatprep.subr.mxu0 0.0
    %863 = vmatpush1.msra.mxu0 0.0
    %864 = vmatprep.subr.mxu0 0.0
    %865 = vmatpush1.msra.mxu0 0.0
    %866 = vmatprep.subr.mxu0 0.0
    %867 = vmatpush1.msra.mxu0 0.0
    %868 = vmatprep.subr.mxu0 0.0
    %869 = vmatpush1.msra.mxu0 0.0
    %870 = vmatprep.subr.mxu0 0.0
    %871 = vmatpush1.msra.mxu0 0.0
    %872 = vmatprep.subr.mxu0 0.0
    %873 = vmatpush1.msra.mxu0 0.0
    %874 = vmatprep.subr.mxu0 0.0
    %875 = vmatpush1.msra.mxu0 0.0
    %876 = vmatprep.subr.mxu0 0.0
    %877 = vmatpush1.msra.mxu0 0.0
    %878 = vmatprep.subr.mxu0 0.0
    %879 = vmatpush1.msra.mxu0 0.0
    %880 = vmatprep.subr.mxu0 0.0
    %881 = vmatpush1.msra.mxu0 0.0
    %882 = vmatprep.subr.mxu0 0.0
    %883 = vmatpush1.msra.mxu0 0.0
    %884 = vmatprep.subr.mxu0 0.0
    %885 = vmatpush1.msra.mxu0 0.0
    %886 = vmatprep.subr.mxu0 0.0
    %887 = vmatpush1.msra.mxu0 0.0
    %888 = vmatprep.subr.mxu0 0.0
    %889 = vmatpush1.msra.mxu0 0.0
    %890 = vmatprep.subr.mxu0 0.0
    %891 = vmatpush1.msra.mxu0 0.0
    %892 = vmatprep.subr.mxu0 0.0
    %893 = vmatpush1.msra.mxu0 0.0
    %894 = vmatprep.subr.mxu0 0.0
    %895 = vmatpush1.msra.mxu0 0.0
    %896 = vmatprep.subr.mxu0 0.0
    %897 = vmatpush1.msra.mxu0 0.0
    %898 = vmatprep.mubr.f32.mxu0 0.0
    %899 = vmatmul.mubr.f32.gmra.mrb[0].mxu0 %v829
    %v900 = vpop.f32.mrb[0].mxu0
    %v901 = vadd.f32 %v821, %v900
    %v902 = vpop.f32.mrb[0].mxu0
    %903 = vmatprep.mubr.f32.mxu0 0.0
    %904 = vmatmul.mubr.f32.gmra.mrb[0].mxu0 %v832
    %v905 = vpop.f32.mrb[0].mxu0
    %v906 = vadd.f32 %v826, %v905
    %v907 = vpop.f32.mrb[0].mxu0
    %908 = vdwg.mxu0
    %v909 = vmax.f32 %v901, 0.0
    %v910 = vmax.f32 %v906, 0.0
    %s911 = scalar_lea.vmem %s3, 112
    %v912 = vld [vmem:[%s911] sm:$0xff]
    %v913 = vld [vmem:[%s911 + $0x8] sm:$0xff]
    %s914 = scalar_lea.vmem %s4, 128
    %v915 = vld [vmem:[%s914] sm:$0xff]
    %v916 = vld [vmem:[%s914 + $0x8] sm:$0xff]
    %918 = vset.pattern.permute.xlu0 0
    %919 = vperm.xlu0 %918, %v915
    %v920 = vpop.permute.xlu0 %919
    %923 = vset.pattern.permute.xlu0 0
    %924 = vperm.xlu0 %923, %v916
    %v925 = vpop.permute.xlu0 %924
    %v928 = vsel %vm142, %v912, 0
    %v931 = vsel %vm142, %v913, 0
    %933 = vmatprep.subr.mxu0 0.0
    %934 = vmatpush1.msra.mxu0 %v909
    %935 = vmatprep.subr.mxu0 0.0
    %936 = vmatpush1.msra.mxu0 %v910
    %937 = vmatprep.subr.mxu0 0.0
    %938 = vmatpush1.msra.mxu0 0.0
    %939 = vmatprep.subr.mxu0 0.0
    %940 = vmatpush1.msra.mxu0 0.0
    %941 = vmatprep.subr.mxu0 0.0
    %942 = vmatpush1.msra.mxu0 0.0
    %943 = vmatprep.subr.mxu0 0.0
    %944 = vmatpush1.msra.mxu0 0.0
    %945 = vmatprep.subr.mxu0 0.0
    %946 = vmatpush1.msra.mxu0 0.0
    %947 = vmatprep.subr.mxu0 0.0
    %948 = vmatpush1.msra.mxu0 0.0
    %949 = vmatprep.subr.mxu0 0.0
    %950 = vmatpush1.msra.mxu0 0.0
    %951 = vmatprep.subr.mxu0 0.0
    %952 = vmatpush1.msra.mxu0 0.0
    %953 = vmatprep.subr.mxu0 0.0
    %954 = vmatpush1.msra.mxu0 0.0
    %955 = vmatprep.subr.mxu0 0.0
    %956 = vmatpush1.msra.mxu0 0.0
    %957 = vmatprep.subr.mxu0 0.0
    %958 = vmatpush1.msra.mxu0 0.0
    %959 = vmatprep.subr.mxu0 0.0
    %960 = vmatpush1.msra.mxu0 0.0
    %961 = vmatprep.subr.mxu0 0.0
    %962 = vmatpush1.msra.mxu0 0.0
    %963 = vmatprep.subr.mxu0 0.0
    %964 = vmatpush1.msra.mxu0 0.0
    %965 = vmatprep.subr.mxu0 0.0
    %966 = vmatpush1.msra.mxu0 0.0
    %967 = vmatprep.subr.mxu0 0.0
    %968 = vmatpush1.msra.mxu0 0.0
    %969 = vmatprep.subr.mxu0 0.0
    %970 = vmatpush1.msra.mxu0 0.0
    %971 = vmatprep.subr.mxu0 0.0
    %972 = vmatpush1.msra.mxu0 0.0
    %973 = vmatprep.subr.mxu0 0.0
    %974 = vmatpush1.msra.mxu0 0.0
    %975 = vmatprep.subr.mxu0 0.0
    %976 = vmatpush1.msra.mxu0 0.0
    %977 = vmatprep.subr.mxu0 0.0
    %978 = vmatpush1.msra.mxu0 0.0
    %979 = vmatprep.subr.mxu0 0.0
    %980 = vmatpush1.msra.mxu0 0.0
    %981 = vmatprep.subr.mxu0 0.0
    %982 = vmatpush1.msra.mxu0 0.0
    %983 = vmatprep.subr.mxu0 0.0
    %984 = vmatpush1.msra.mxu0 0.0
    %985 = vmatprep.subr.mxu0 0.0
    %986 = vmatpush1.msra.mxu0 0.0
    %987 = vmatprep.subr.mxu0 0.0
    %988 = vmatpush1.msra.mxu0 0.0
    %989 = vmatprep.subr.mxu0 0.0
    %990 = vmatpush1.msra.mxu0 0.0
    %991 = vmatprep.subr.mxu0 0.0
    %992 = vmatpush1.msra.mxu0 0.0
    %993 = vmatprep.subr.mxu0 0.0
    %994 = vmatpush1.msra.mxu0 0.0
    %995 = vmatprep.subr.mxu0 0.0
    %996 = vmatpush1.msra.mxu0 0.0
    %997 = vmatprep.mubr.f32.mxu0 0.0
    %998 = vmatmul.mubr.f32.gmra.mrb[0].mxu0 %v928
    %v999 = vpop.f32.mrb[0].mxu0
    %v1000 = vadd.f32 %v920, %v999
    %v1001 = vpop.f32.mrb[0].mxu0
    %1002 = vmatprep.mubr.f32.mxu0 0.0
    %1003 = vmatmul.mubr.f32.gmra.mrb[0].mxu0 %v931
    %v1004 = vpop.f32.mrb[0].mxu0
    %v1005 = vadd.f32 %v925, %v1004
    %v1006 = vpop.f32.mrb[0].mxu0
    %1007 = vdwg.mxu0
    %v1008 = vmax.f32 %v1000, %v1005
    %v1009 = vrot.slane %v1008, 4
    %v1010 = vmax.f32 %v1008, %v1009
    %v1011 = vrot.slane %v1010, 2
    %v1012 = vmax.f32 %v1010, %v1011
    %v1013 = vrot.slane %v1012, 1
    %v1014 = vmax.f32 %v1012, %v1013
    %v1015 = vsub.f32 %v1000, %v1014
    %v1016 = vsub.f32 %v1005, %v1014
    %v1017 = vmul.f32 %v1015, 1.442695
    %v1018 = vpow.pop %v1017
    %v1019 = vmul.f32 %v1016, 1.442695
    %v1020 = vpow.pop %v1019
    %v1021 = vadd.f32 %v1018, %v1020
    %v1022 = vrot.slane %v1021, 4
    %v1023 = vadd.f32 %v1021, %v1022
    %v1024 = vrot.slane %v1023, 2
    %v1025 = vadd.f32 %v1023, %v1024
    %v1026 = vrot.slane %v1025, 1
    %v1027 = vadd.f32 %v1025, %v1026
    %v1028 = vrcp.pop %v1027
    %v1029 = vmul.f32 %v1018, %v1028
    %1030 = vst [vmem:[#allocation2] sm:$0xff] %v1029
    // Predicated region
    $region22: #{tpu_custom_call.1} parent=1 // pred_check
      _
    $region23: #{tpu_custom_call.1} parent=1 // pred_check_branch
      %1032 = sbr.rel (0) target = $region25
    $region24: #{tpu_custom_call.1} parent=1 // pred_region
      %s1034 = ssub.s32 128, 128
      %1035 = vsyncadd [#allocation3], %s1034
      %s1037 = sshll.u32 [#allocation2], 4
      %s1038 = int_to_ptr.vmem [resolvable:$true] %s1037
      %1040 = dma.vmem_to_hbm [thread:$0]  %s1038, 128, %s5, [#allocation3]
    $region25: #{tpu_custom_call.1} parent=1 // pred_fallthru
      _
    // Predicated region
    $region26: #{tpu_custom_call.1} parent=1 // pred_check
      _
    $region27: #{tpu_custom_call.1} parent=1 // pred_check_branch
      %1042 = sbr.rel (0) target = $region29
    $region28: #{tpu_custom_call.1} parent=1 // pred_region
      %1043 = dma.done [#allocation3], 128
    $region29: #{tpu_custom_call.1} parent=1 // pred_fallthru
      _
    %1044 = vsyncpa [#allocation3], 1

</llo_original>
